<compile_context>
chip_gen: v7x
topology: tpu7x:2x2x1
jax: 0.10.0
libtpu: 0.0.40
codegen_flags: <defaults>
</compile_context>

<pallas_src>
import jax
import jax.numpy as jnp
from jax.experimental import pallas as pl
from jax.experimental.pallas import tpu as pltpu


# ---------------------------------------------------------------------------
# Kernels
# ---------------------------------------------------------------------------

def _se_fused_kernel(x_ref, w1_ref, w2_ref, o_ref):
    # x_ref/o_ref: (Bt, C, HW)
    # w1_ref: (C, Cr)  -- pre-scaled by 1/HW in the wrapper
    # w2_ref: (Cr, C)
    #
    # Squeeze: spatial sum accumulated in f32 (the 1/HW mean normalization is
    # folded into w1, so no full-slab divide is needed).
    y = jnp.sum(x_ref[...], axis=-1, dtype=jnp.float32)                 # (Bt, C)

    # Excitation: Linear -> ReLU -> Linear -> Sigmoid (no biases), all in f32.
    h = jnp.dot(y, w1_ref[...], preferred_element_type=jnp.float32)     # (Bt, Cr)
    h = jnp.maximum(h, 0.0)
    s = jnp.dot(h, w2_ref[...], preferred_element_type=jnp.float32)     # (Bt, C)
    s = jax.nn.sigmoid(s)

    # Scale: re-read x_ref here (rather than keeping the whole slab live as a
    # single value across the gate math) so the reduce and the scale stream
    # independently from the VMEM buffer and vreg pressure stays low.
    o_ref[...] = x_ref[...] * s.astype(o_ref.dtype)[:, :, None]


def _se_scale_kernel(x_ref, g_ref, o_ref):
    # Pure streaming scale for the two-pass path.
    # x_ref/o_ref: (1, C, HWt); g_ref: (1, C, 1) f32 gates.
    o_ref[...] = x_ref[...] * g_ref[...].astype(o_ref.dtype)


# ---------------------------------------------------------------------------
# Wrapper
# ---------------------------------------------------------------------------

def _usable_vmem_bytes():
    """Generation-aware scoped-VMEM budget (~75% of physical per-core VMEM).

    ~96 MiB on v5e/v6e (128 MiB physical), ~48 MiB on v7x (64 MiB physical),
    leaving headroom for compiler-internal scratch.
    """
    cap = 64 << 20  # conservative fallback (v7x per-TensorCore size)
    try:
        info = pltpu.get_tpu_info()
        cap = int(getattr(info, "vmem_capacity_bytes", cap) or cap)
    except Exception:
        pass
    return (cap * 3) // 4


def se_layer(x_nchw, w1, w2):
    """x_nchw: (B, C, H, W).
    w1: PyTorch fc[0].weight, shape (C//r, C)
    w2: PyTorch fc[2].weight, shape (C, C//r)
    Returns (B, C, H, W), same semantics as SELayer.forward.
    """
    b, c, h, w = x_nchw.shape
    hw = h * w
    cr = w1.shape[0]
    itemsize = jnp.dtype(x_nchw.dtype).itemsize

    x3 = x_nchw.reshape(b, c, hw)

    usable = _usable_vmem_bytes()
    slack = 2 << 20           # compiler-internal scratch headroom
    target_buf = 8 << 20      # aim for multi-MiB pipeline buffers

    per_batch_bytes = c * hw * itemsize
    # Both tiny weights, at the *default* double-buffering (4 buffers total).
    # (pl.Buffered(1) would save half of this, but the default is kept for
    # maximum portability and simply accounted for here.)
    weight_bytes = 4 * c * cr * 4

    # Largest Bt whose in+out double-buffered blocks (+weights+slack) fit VMEM.
    bt_fit = (usable - weight_bytes - slack) // max(1, 4 * per_batch_bytes)
    fused_fits = bt_fit >= 1

    # Two-pass path when the per-batch slab can't fit VMEM, or when B == 1 but
    # the spatial axis is big enough that tiling it gives grid parallelism
    # (v7x dual TensorCore) and pipeline overlap.
    use_two_pass = (not fused_fits) or (
        b == 1 and hw >= 512 and per_batch_bytes >= (2 << 20)
    )

    if not use_two_pass:
        # ----- Fused path: pool + gate + scale in one kernel, batch-blocked.
        bt = int(min(
            b,
            bt_fit,
            max(1, target_buf // per_batch_bytes),
            max(1, (b + 1) // 2),        # keep >= 2 grid steps when B >= 2
        ))
        grid_b = pl.cdiv(b, bt)

        # Fold 1/HW into the first FC weight; transpose both so the kernel
        # does plain y @ W (== y @ W^T of the PyTorch Linear).
        w1t = (w1.T * (1.0 / float(hw))).astype(jnp.float32)            # (C, Cr)
        w2t = w2.T.astype(jnp.float32)                                  # (Cr, C)

        need = 4 * bt * per_batch_bytes + weight_bytes + slack
        vmem_limit = int(min(usable, max(need, 16 << 20)))

        cost = pl.CostEstimate(
            flops=int(2 * b * c * cr * 2 + 2 * b * c * hw),
            transcendentals=int(b * c),
            bytes_accessed=int(2 * b * c * hw * itemsize + 2 * c * cr * 4),
        )

        out3 = pl.pallas_call(
            _se_fused_kernel,
            out_shape=jax.ShapeDtypeStruct((b, c, hw), x3.dtype),
            grid=(grid_b,),
            in_specs=[
                pl.BlockSpec((bt, c, hw), lambda i: (i, 0, 0)),
                pl.BlockSpec((c, cr), lambda i: (0, 0)),   # pinned, VMEM-resident
                pl.BlockSpec((cr, c), lambda i: (0, 0)),   # pinned, VMEM-resident
            ],
            out_specs=pl.BlockSpec((bt, c, hw), lambda i: (i, 0, 0)),
            compiler_params=pltpu.CompilerParams(
                dimension_semantics=("parallel",),
                vmem_limit_bytes=vmem_limit,
            ),
            cost_estimate=cost,
        )(x3, w1t, w2t)

    else:
        # ----- Two-pass path.
        # Pass 1: pooled gates with plain XLA (tiny compared to the scale).
        y = jnp.mean(x3.astype(jnp.float32), axis=-1)                   # (B, C)
        hgate = jnp.maximum(y @ w1.T.astype(jnp.float32), 0.0)          # (B, Cr)
        gates = jax.nn.sigmoid(hgate @ w2.T.astype(jnp.float32))        # (B, C)
        g3 = gates.reshape(b, c, 1)                                     # lane-safe (C,1) tail

        # Pass 2: HW-tiled streaming scale. Tile chosen as a multiple of 128
        # (lane-dense) that keeps 2 in + 2 out buffers within the VMEM budget.
        hwt = min(hw,
                  (usable - slack) // max(1, 4 * c * itemsize),
                  max(1, target_buf // max(1, c * itemsize)))
        if hwt >= hw:
            hwt = hw
        else:
            hwt = max(128, (hwt // 128) * 128)
            if hwt >= hw:
                hwt = hw
        grid = (b, pl.cdiv(hw, hwt))

        need = 4 * c * hwt * itemsize + 2 * c * 4 + slack
        vmem_limit = int(min(usable, max(need, 16 << 20)))

        cost = pl.CostEstimate(
            flops=int(b * c * hw),
            transcendentals=0,
            bytes_accessed=int(2 * b * c * hw * itemsize + b * c * 4),
        )

        out3 = pl.pallas_call(
            _se_scale_kernel,
            out_shape=jax.ShapeDtypeStruct((b, c, hw), x3.dtype),
            grid=grid,
            in_specs=[
                pl.BlockSpec((1, c, hwt), lambda bi, ti: (bi, 0, ti)),
                pl.BlockSpec((1, c, 1), lambda bi, ti: (bi, 0, 0)),
            ],
            out_specs=pl.BlockSpec((1, c, hwt), lambda bi, ti: (bi, 0, ti)),
            compiler_params=pltpu.CompilerParams(
                dimension_semantics=("parallel", "parallel"),
                vmem_limit_bytes=vmem_limit,
            ),
            cost_estimate=cost,
        )(x3, g3)

    return out3.reshape(b, c, h, w)


def _reference(x, w1, w2):
    # Pure-JAX reference replicating the PyTorch module exactly.
    y = jnp.mean(x, axis=(2, 3))                  # (B, C)
    y = jnp.maximum(y @ w1.T, 0.0)                # (B, C//r)
    y = jax.nn.sigmoid(y @ w2.T)                  # (B, C)
    return x * y[:, :, None, None]


if __name__ == "__main__":
    key = jax.random.PRNGKey(0)
    kx, k1, k2 = jax.random.split(key, 3)

    B, C, H, W = 2, 64, 16, 16
    reduction = 16
    Cr = C // reduction

    x = jax.random.normal(kx, (B, C, H, W), dtype=jnp.float32)
    # Deterministic synthetic weights (PyTorch Linear weight shapes).
    w1 = jax.random.normal(k1, (Cr, C), dtype=jnp.float32) * (1.0 / jnp.sqrt(C))
    w2 = jax.random.normal(k2, (C, Cr), dtype=jnp.float32) * (1.0 / jnp.sqrt(Cr))

    out = se_layer(x, w1, w2)
    out = jax.block_until_ready(out)

    ref = _reference(x, w1, w2)
    assert out.shape == (B, C, H, W)
    assert jnp.allclose(out, ref, atol=1e-5, rtol=1e-5), "mismatch vs reference"

    print("KERNEL_OK")
</pallas_src>

<mosaic_0001>
module attributes {stable_mosaic.version = 11 : i64} {
  func.func @_se_fused_kernel(%arg0: i32, %arg1: memref<1x64x256xf32, #tpu.memory_space<vmem>>, %arg2: memref<64x4xf32, #tpu.memory_space<vmem>>, %arg3: memref<4x64xf32, #tpu.memory_space<vmem>>, %arg4: memref<1x64x256xf32, #tpu.memory_space<vmem>>) attributes {dimension_semantics = [#tpu.dimension_semantics<parallel>], iteration_bounds = array<i64: 2>, scalar_prefetch = 0 : i64, scratch_operands = 0 : i64, tpu.core_type = #tpu.core_type<tc>, window_params = [{transform_indices = @transform_0, window_bounds = array<i64: 1, 64, 256>}, {pipeline_mode = #tpu.pipeline_mode<synchronous>, transform_indices = @transform_1, window_bounds = array<i64: 64, 4>}, {pipeline_mode = #tpu.pipeline_mode<synchronous>, transform_indices = @transform_2, window_bounds = array<i64: 4, 64>}, {transform_indices = @transform_3, window_bounds = array<i64: 1, 64, 256>}]} {
    %c0 = arith.constant 0 : index
    %c0_0 = arith.constant 0 : index
    %c0_1 = arith.constant 0 : index
    %0 = vector.load %arg1[%c0, %c0_0, %c0_1] : memref<1x64x256xf32, #tpu.memory_space<vmem>>, vector<1x64x256xf32>
    %cst = arith.constant dense<0.000000e+00> : vector<1x64xf32>
    %1 = vector.multi_reduction <add>, %0, %cst [2] : vector<1x64x256xf32> to vector<1x64xf32>
    %c0_2 = arith.constant 0 : index
    %c0_3 = arith.constant 0 : index
    %2 = vector.load %arg2[%c0_2, %c0_3] : memref<64x4xf32, #tpu.memory_space<vmem>>, vector<64x4xf32>
    %cst_4 = arith.constant dense<0.000000e+00> : vector<1x4xf32>
    %3 = tpu.matmul %1, %2, %cst_4 {dimension_numbers = #tpu.dot_dimension_numbers<[1], [0], [0], [1], [0, 0, 1, 1], [], []>} : vector<1x64xf32>, vector<64x4xf32>, vector<1x4xf32> -> vector<1x4xf32>
    %cst_5 = arith.constant 0.000000e+00 : f32
    %4 = vector.broadcast %cst_5 : f32 to vector<1x4xf32>
    %5 = arith.maximumf %3, %4 : vector<1x4xf32>
    %c0_6 = arith.constant 0 : index
    %c0_7 = arith.constant 0 : index
    %6 = vector.load %arg3[%c0_6, %c0_7] : memref<4x64xf32, #tpu.memory_space<vmem>>, vector<4x64xf32>
    %cst_8 = arith.constant dense<0.000000e+00> : vector<1x64xf32>
    %7 = tpu.matmul %5, %6, %cst_8 {dimension_numbers = #tpu.dot_dimension_numbers<[1], [0], [0], [1], [0, 0, 1, 1], [], []>} : vector<1x4xf32>, vector<4x64xf32>, vector<1x64xf32> -> vector<1x64xf32>
    %8 = arith.negf %7 : vector<1x64xf32>
    %9 = math.exp %8 : vector<1x64xf32>
    %cst_9 = arith.constant 1.000000e+00 : f32
    %10 = vector.broadcast %cst_9 : f32 to vector<1x64xf32>
    %11 = arith.addf %10, %9 : vector<1x64xf32>
    %12 = arith.divf %10, %11 : vector<1x64xf32>
    %c0_10 = arith.constant 0 : index
    %c0_11 = arith.constant 0 : index
    %c0_12 = arith.constant 0 : index
    %13 = vector.load %arg1[%c0_10, %c0_11, %c0_12] : memref<1x64x256xf32, #tpu.memory_space<vmem>>, vector<1x64x256xf32>
    %14 = vector.shape_cast %12 : vector<1x64xf32> to vector<1x64x1xf32>
    %15 = vector.broadcast %14 : vector<1x64x1xf32> to vector<1x64x256xf32>
    %16 = arith.mulf %13, %15 : vector<1x64x256xf32>
    %c0_13 = arith.constant 0 : index
    %c0_14 = arith.constant 0 : index
    %c0_15 = arith.constant 0 : index
    %17 = vector.load %arg4[%c0_13, %c0_14, %c0_15] : memref<1x64x256xf32, #tpu.memory_space<vmem>>, vector<1x64x256xf32>
    tpu.vector_store %arg4[%c0_13, %c0_14, %c0_15], %16 {strides = array<i32>} : memref<1x64x256xf32, #tpu.memory_space<vmem>>, vector<1x64x256xf32>,
    return
  }
  func.func @transform_0(%arg0: i32) -> (i32, i32, i32) {
    %c0_i32 = arith.constant 0 : i32
    %c0_i32_0 = arith.constant 0 : i32
    %c0_i32_1 = arith.constant 0 : i32
    return %arg0, %c0_i32, %c0_i32_0 : i32, i32, i32
  }
  func.func @transform_1(%arg0: i32) -> (i32, i32) {
    %c0_i32 = arith.constant 0 : i32
    %c0_i32_0 = arith.constant 0 : i32
    %c0_i32_1 = arith.constant 0 : i32
    return %c0_i32, %c0_i32_0 : i32, i32
  }
  func.func @transform_2(%arg0: i32) -> (i32, i32) {
    %c0_i32 = arith.constant 0 : i32
    %c0_i32_0 = arith.constant 0 : i32
    %c0_i32_1 = arith.constant 0 : i32
    return %c0_i32, %c0_i32_0 : i32, i32
  }
  func.func @transform_3(%arg0: i32) -> (i32, i32, i32) {
    %c0_i32 = arith.constant 0 : i32
    %c0_i32_0 = arith.constant 0 : i32
    %c0_i32_1 = arith.constant 0 : i32
    return %arg0, %c0_i32, %c0_i32_0 : i32, i32, i32
  }
}

</mosaic_0001>

<llo_original>
// kernel: tpu_custom_call.1
$region0: #{tpu_custom_call.1}
  #allocation0 [shape = 'u32[]', space=smem, size = 0x4, offset = 0x4, fixed_abs, tag = 'smem constant byte address 0x4 - core index']
  #allocation1 [shape = 'u32[144,128]{1,0:T(1,128)}', space=vmem, size = 0x12000, scoped, tag = 'internal scratch']
  %s0 = inlined_call_operand.hbm [shape: f32[2,64,256], index: 0, kind: input, shape index: {}]
  %s1 = inlined_call_operand.vmem [shape: f32[64,4], index: 1, kind: input, shape index: {}]
  %s2 = inlined_call_operand.vmem [shape: f32[4,64], index: 2, kind: input, shape index: {}]
  %s3 = inlined_call_operand.hbm [shape: f32[2,64,256], index: 3, kind: output, shape index: {}]
  %s4 = sld [smem:[#allocation0]]
  $region49: #{tpu_custom_call.1} parent=0
    _
  %s6 = ssub.s32 1, %s4
  %s7 = scalar_select 0, %s6, %s4
  $region1: #{tpu_custom_call.1} parent=0
    #allocation2 [shape = 'u8[131072]{0}', space=vmem, size = 0x20000, scoped, tag = 'input window, operand 0']
    #allocation3 [shape = 's32[2]{0}', space=sflag, size = 0x8, scoped, tag = 'scoped memory for tpu_custom_call.1']
    #allocation4 [shape = 's32[2]{0}', space=sflag, size = 0x8, scoped, tag = 'scoped memory for tpu_custom_call.1']
    #allocation5 [shape = 'u8[131072]{0}', space=vmem, size = 0x20000, scoped, tag = 'output window, operand 0']
    %8 = vsyncpa [#allocation3], 0
    %s9 = scalar_lea.sflag [#allocation3], 1
    %10 = vsyncpa %s9, 0
    %11 = vsyncpa [#allocation4], 0
    %s12 = scalar_lea.sflag [#allocation4], 1
    %13 = vsyncpa %s12, 0
    loop: start=0, step=1, limit=4
    $region2: #{tpu_custom_call.1} parent=1 // loop_pre_header
      _
    $region3: #{tpu_custom_call.1} parent=1 // loop_header
      %s15 = sphi 0, %s19
      %p16 = scmp.ge.s32.totalorder %s15, 4
      %s25 = sphi 0, %s27
      %s28 = sphi 0, %s25
      %s29 = sphi 0, %s28
      %s45 = sphi 0, %s29
      %s49 = sphi 0, %s49
      %s51 = sphi 0, %s49
      %s52 = sphi 0, %s51
      %s66 = sphi 0, %s52
      %s70 = sphi 0, %s70
      %s72 = sphi 0, %s70
      %s73 = sphi 0, %s72
      %s87 = sphi 0, %s73
      %s93 = sphi 0, %s95
      %s96 = sphi 0, %s93
      %s97 = sphi 0, %s96
      %s113 = sphi 0, %s97
    $region4: #{tpu_custom_call.1} parent=1 // loop_header_branch
      %18 = sbr.rel (%p16) target = $region8
    $region5: #{tpu_custom_call.1} parent=1 // loop_body
      %s20 = ssub.s32 %s15, 1
      %s21 = ssub.s32 %s15, 2
      %s22 = sadd.s32 %s15, 1
      %s23 = ssub.s32 %s15, %s22
      %p24 = scmp.eq.s32.totalorder %s23, 0
      %s26 = sadd.s32 %s25, 1
      %s27 = scalar_select %p24, %s25, %s26
      %p30 = pneg %p24
      %p31 = scmp.eq.s32.totalorder %s15, 1
      %p32 = por %p30, %p31
      %p33 = scmp.ne.s32.totalorder %s25, %s28
      %p34 = scmp.eq.s32.totalorder %s15, 0
      %p35 = por %p33, %p34
      %p36 = scmp.ne.s32.totalorder %s25, %s28
      %p37 = scmp.eq.s32.totalorder %s20, 1
      %p38 = por %p36, %p37
      %p39 = scmp.ne.s32.totalorder %s28, %s29
      %p40 = scmp.eq.s32.totalorder %s20, 0
      %p41 = por %p39, %p40
      %p42 = scmp.ne.s32.totalorder %s28, %s29
      %p43 = scmp.eq.s32.totalorder %s21, 1
      %p44 = por %p42, %p43
      %p46 = scmp.ne.s32.totalorder %s29, %s45
      %p47 = scmp.eq.s32.totalorder %s21, 0
      %p48 = por %p46, %p47
      %s50 = sadd.s32 %s49, 1
      %p53 = scmp.eq.s32.totalorder %s15, 1
      %p54 = scmp.ne.s32.totalorder %s49, %s51
      %p55 = scmp.eq.s32.totalorder %s15, 0
      %p56 = por %p54, %p55
      %p57 = scmp.ne.s32.totalorder %s49, %s51
      %p58 = scmp.eq.s32.totalorder %s20, 1
      %p59 = por %p57, %p58
      %p60 = scmp.ne.s32.totalorder %s51, %s52
      %p61 = scmp.eq.s32.totalorder %s20, 0
      %p62 = por %p60, %p61
      %p63 = scmp.ne.s32.totalorder %s51, %s52
      %p64 = scmp.eq.s32.totalorder %s21, 1
      %p65 = por %p63, %p64
      %p67 = scmp.ne.s32.totalorder %s52, %s66
      %p68 = scmp.eq.s32.totalorder %s21, 0
      %p69 = por %p67, %p68
      %s71 = sadd.s32 %s70, 1
      %p74 = scmp.eq.s32.totalorder %s15, 1
      %p75 = scmp.ne.s32.totalorder %s70, %s72
      %p76 = scmp.eq.s32.totalorder %s15, 0
      %p77 = por %p75, %p76
      %p78 = scmp.ne.s32.totalorder %s70, %s72
      %p79 = scmp.eq.s32.totalorder %s20, 1
      %p80 = por %p78, %p79
      %p81 = scmp.ne.s32.totalorder %s72, %s73
      %p82 = scmp.eq.s32.totalorder %s20, 0
      %p83 = por %p81, %p82
      %p84 = scmp.ne.s32.totalorder %s72, %s73
      %p85 = scmp.eq.s32.totalorder %s21, 1
      %p86 = por %p84, %p85
      %p88 = scmp.ne.s32.totalorder %s73, %s87
      %p89 = scmp.eq.s32.totalorder %s21, 0
      %p90 = por %p88, %p89
      %s91 = ssub.s32 %s15, %s22
      %p92 = scmp.eq.s32.totalorder %s91, 0
      %s94 = sadd.s32 %s93, 1
      %s95 = scalar_select %p92, %s93, %s94
      %p98 = pneg %p92
      %p99 = scmp.eq.s32.totalorder %s15, 1
      %p100 = por %p98, %p99
      %p101 = scmp.ne.s32.totalorder %s93, %s96
      %p102 = scmp.eq.s32.totalorder %s15, 0
      %p103 = por %p101, %p102
      %p104 = scmp.ne.s32.totalorder %s93, %s96
      %p105 = scmp.eq.s32.totalorder %s20, 1
      %p106 = por %p104, %p105
      %p107 = scmp.ne.s32.totalorder %s96, %s97
      %p108 = scmp.eq.s32.totalorder %s20, 0
      %p109 = por %p107, %p108
      %p110 = scmp.ne.s32.totalorder %s96, %s97
      %p111 = scmp.eq.s32.totalorder %s21, 1
      %p112 = por %p110, %p111
      %p114 = scmp.ne.s32.totalorder %s97, %s113
      %p115 = scmp.eq.s32.totalorder %s21, 0
      %p116 = por %p114, %p115
      %p117 = scmp.le.s32.totalorder 1, %s15
      %p118 = scmp.lt.s32.totalorder %s15, 3
      %p119 = pnand %p117, %p118
      %p120 = pneg %p119
      // Predicated region
      $region9: #{tpu_custom_call.1} parent=5 // pred_check
        _
      $region10: #{tpu_custom_call.1} parent=5 // pred_check_branch
        %122 = sbr.rel (%p119) target = $region12
      $region11: #{tpu_custom_call.1} parent=5 // pred_region
        %s123 = ssub.s32 %s15, 1
        // Predicated region
        $region13: #{tpu_custom_call.1} parent=11 // pred_check
          %p124 = pneg %p62
        $region14: #{tpu_custom_call.1} parent=11 // pred_check_branch
          %126 = sbr.rel (%p124) target = $region16
        $region15: #{tpu_custom_call.1} parent=11 // pred_region
          _
        $region16: #{tpu_custom_call.1} parent=11 // pred_fallthru
          _
        // Predicated region
        $region17: #{tpu_custom_call.1} parent=11 // pred_check
          %p127 = pneg %p83
        $region18: #{tpu_custom_call.1} parent=11 // pred_check_branch
          %129 = sbr.rel (%p127) target = $region20
        $region19: #{tpu_custom_call.1} parent=11 // pred_region
          _
        $region20: #{tpu_custom_call.1} parent=11 // pred_fallthru
          _
      $region12: #{tpu_custom_call.1} parent=5 // pred_fallthru
        _
      %p130 = scmp.lt.s32.totalorder %s15, 2
      // Predicated region
      $region21: #{tpu_custom_call.1} parent=5 // pred_check
        %p131 = pneg %p130
      $region22: #{tpu_custom_call.1} parent=5 // pred_check_branch
        %133 = sbr.rel (%p131) target = $region24
      $region23: #{tpu_custom_call.1} parent=5 // pred_region
        // Predicated region
        $region25: #{tpu_custom_call.1} parent=23 // pred_check
          %p134 = pneg %p35
        $region26: #{tpu_custom_call.1} parent=23 // pred_check_branch
          %136 = sbr.rel (%p134) target = $region28
        $region27: #{tpu_custom_call.1} parent=23 // pred_region
          %s137 = sand.u32 %s25, 1
          %s138 = scalar_lea.sflag [#allocation3], %s137
          %s139 = sand.u32 %s25, 1
          %s140 = smul.addr %s139, 128
          %s141 = scalar_lea.vmem [#allocation2], %s140
          %s143 = ssub.s32 2048, 2048
          %144 = vsyncadd %s138, %s143
          %s145 = smul.addr %s15, 16
          %s146 = smul.addr %s145, 128
          %s147 = scalar_lea.hbm %s0, %s146
          %s148 = sshll.u32 %s141, 4
          %s149 = int_to_ptr.vmem [resolvable:$true] %s148
          %154 = dma.hbm_to_vmem [thread:$0]  %s147, 2048, %s149, %s138, 256, 256, 16
        $region28: #{tpu_custom_call.1} parent=23 // pred_fallthru
          _
      $region24: #{tpu_custom_call.1} parent=5 // pred_fallthru
        _
      %p155 = scmp.le.s32.totalorder 1, %s15
      %p156 = scmp.lt.s32.totalorder %s15, 3
      %p157 = pnand %p155, %p156
      %p158 = pneg %p157
      // Predicated region
      $region29: #{tpu_custom_call.1} parent=5 // pred_check
        _
      $region30: #{tpu_custom_call.1} parent=5 // pred_check_branch
        %160 = sbr.rel (%p157) target = $region32
      $region31: #{tpu_custom_call.1} parent=5 // pred_region
        %s161 = ssub.s32 %s15, 1
        %s162 = sand.u32 %s28, 1
        %s163 = scalar_lea.sflag [#allocation3], %s162
        %s164 = sand.u32 %s28, 1
        %s165 = smul.addr %s164, 128
        %s166 = scalar_lea.vmem [#allocation2], %s165
        // Predicated region
        $region33: #{tpu_custom_call.1} parent=31 // pred_check
          %p167 = pneg %p41
        $region34: #{tpu_custom_call.1} parent=31 // pred_check_branch
          %169 = sbr.rel (%p167) target = $region36
        $region35: #{tpu_custom_call.1} parent=31 // pred_region
          %170 = dma.done %s163, 2048
        $region36: #{tpu_custom_call.1} parent=31 // pred_fallthru
          _
        %s171 = sand.u32 %s28, 1
        %s172 = scalar_lea.sflag [#allocation3], %s171
        %s173 = sand.u32 %s28, 1
        %s174 = smul.addr %s173, 128
        %s175 = scalar_lea.vmem [#allocation2], %s174
        %p176 = pneg %p41
        %p177 = pneg %p38
        %p178 = pneg %p62
        %p179 = pneg %p59
        %p180 = pneg %p83
        %p181 = pneg %p80
        %p182 = pneg %p109
        %p183 = pneg %p106
        %s184 = sand.u32 %s96, 1
        %s185 = scalar_lea.sflag [#allocation4], %s184
        %s186 = sand.u32 %s96, 1
        %s187 = smul.addr %s186, 128
        %s188 = scalar_lea.vmem [#allocation5], %s187
        %v189 = vld [vmem:[%s166] sm:$0xff]
        %v190 = vld [vmem:[%s166 + $0x8] sm:$0xff]
        %v191 = vld [vmem:[%s166 + $0x10] sm:$0xff]
        %v192 = vld [vmem:[%s166 + $0x18] sm:$0xff]
        %v193 = vld [vmem:[%s166 + $0x20] sm:$0xff]
        %v194 = vld [vmem:[%s166 + $0x28] sm:$0xff]
        %v195 = vld [vmem:[%s166 + $0x30] sm:$0xff]
        %v196 = vld [vmem:[%s166 + $0x38] sm:$0xff]
        %v197 = vld [vmem:[%s166 + $0x40] sm:$0xff]
        %v198 = vld [vmem:[%s166 + $0x48] sm:$0xff]
        %v199 = vld [vmem:[%s166 + $0x50] sm:$0xff]
        %v200 = vld [vmem:[%s166 + $0x58] sm:$0xff]
        %v201 = vld [vmem:[%s166 + $0x60] sm:$0xff]
        %v202 = vld [vmem:[%s166 + $0x68] sm:$0xff]
        %v203 = vld [vmem:[%s166 + $0x70] sm:$0xff]
        %v204 = vld [vmem:[%s166 + $0x78] sm:$0xff]
        %v205 = vadd.f32 %v189, %v190
        %206 = vadd.xlane.f32.xlu0 %v205
        %v207 = vpop.xlane.xlu0 %206
        %v208 = vadd.f32 %v191, %v192
        %209 = vadd.xlane.f32.xlu0 %v208
        %v210 = vpop.xlane.xlu0 %209
        %v211 = vadd.f32 %v193, %v194
        %212 = vadd.xlane.f32.xlu0 %v211
        %v213 = vpop.xlane.xlu0 %212
        %v214 = vadd.f32 %v195, %v196
        %215 = vadd.xlane.f32.xlu0 %v214
        %v216 = vpop.xlane.xlu0 %215
        %v217 = vadd.f32 %v197, %v198
        %218 = vadd.xlane.f32.xlu0 %v217
        %v219 = vpop.xlane.xlu0 %218
        %v220 = vadd.f32 %v199, %v200
        %221 = vadd.xlane.f32.xlu0 %v220
        %v222 = vpop.xlane.xlu0 %221
        %v223 = vadd.f32 %v201, %v202
        %224 = vadd.xlane.f32.xlu0 %v223
        %v225 = vpop.xlane.xlu0 %224
        %v226 = vadd.f32 %v203, %v204
        %227 = vadd.xlane.f32.xlu0 %v226
        %v228 = vpop.xlane.xlu0 %227
        %v229 = vld [vmem:[%s1] sm:$0xff]
        %v230 = vld [vmem:[%s1 + $0x8] sm:$0xff]
        %v231 = vld [vmem:[%s1 + $0x10] sm:$0xff]
        %v232 = vld [vmem:[%s1 + $0x18] sm:$0xff]
        %v233 = vld [vmem:[%s1 + $0x20] sm:$0xff]
        %v234 = vld [vmem:[%s1 + $0x28] sm:$0xff]
        %v235 = vld [vmem:[%s1 + $0x30] sm:$0xff]
        %v236 = vld [vmem:[%s1 + $0x38] sm:$0xff]
        %v245 = vlaneseq
        %v246 = vand.u32 %v245, 127
        %v247 = vlaneseq
        %v248 = vshrl.u32 %v247, 7
        %v249 = vsub.s32 %v246, %v248
        %v250 = vrot.slane %v207, %v249
        %v251 = vadd.s32 %v246, 4294967288
        %v252 = vlaneseq
        %v253 = vshrl.u32 %v252, 7
        %v254 = vsub.s32 %v251, %v253
        %v255 = vrot.slane %v210, %v254
        %vm256 = vcmask 130112
        %v257 = vsel %vm256, %v255, %v250
        %v258 = vadd.s32 %v246, 4294967280
        %v259 = vlaneseq
        %v260 = vshrl.u32 %v259, 7
        %v261 = vsub.s32 %v258, %v260
        %v262 = vrot.slane %v213, %v261
        %vm263 = vcmask 195712
        %v264 = vsel %vm263, %v262, %v257
        %v265 = vadd.s32 %v246, 4294967272
        %v266 = vlaneseq
        %v267 = vshrl.u32 %v266, 7
        %v268 = vsub.s32 %v265, %v267
        %v269 = vrot.slane %v216, %v268
        %vm270 = vcmask 261312
        %v271 = vsel %vm270, %v269, %v264
        %v272 = vadd.s32 %v246, 4294967264
        %v273 = vlaneseq
        %v274 = vshrl.u32 %v273, 7
        %v275 = vsub.s32 %v272, %v274
        %v276 = vrot.slane %v219, %v275
        %vm277 = vcmask 326912
        %v278 = vsel %vm277, %v276, %v271
        %v279 = vadd.s32 %v246, 4294967256
        %v280 = vlaneseq
        %v281 = vshrl.u32 %v280, 7
        %v282 = vsub.s32 %v279, %v281
        %v283 = vrot.slane %v222, %v282
        %vm284 = vcmask 392512
        %v285 = vsel %vm284, %v283, %v278
        %v286 = vadd.s32 %v246, 4294967248
        %v287 = vlaneseq
        %v288 = vshrl.u32 %v287, 7
        %v289 = vsub.s32 %v286, %v288
        %v290 = vrot.slane %v225, %v289
        %vm291 = vcmask 458112
        %v292 = vsel %vm291, %v290, %v285
        %v293 = vadd.s32 %v246, 4294967240
        %v294 = vlaneseq
        %v295 = vshrl.u32 %v294, 7
        %v296 = vsub.s32 %v293, %v295
        %v297 = vrot.slane %v228, %v296
        %vm298 = vcmask 523712
        %v299 = vsel %vm298, %v297, %v292
        %vm300 = vcmask 523264
        %v301 = vsel %vm300, %v299, 0
        %303 = vmatprep.subr.mxu0 0.0
        %304 = vmatpush1.msra.mxu0 %v229
        %305 = vmatprep.subr.mxu0 0.0
        %306 = vmatpush1.msra.mxu0 %v230
        %307 = vmatprep.subr.mxu0 0.0
        %308 = vmatpush1.msra.mxu0 %v231
        %309 = vmatprep.subr.mxu0 0.0
        %310 = vmatpush1.msra.mxu0 %v232
        %311 = vmatprep.subr.mxu0 0.0
        %312 = vmatpush1.msra.mxu0 %v233
        %313 = vmatprep.subr.mxu0 0.0
        %314 = vmatpush1.msra.mxu0 %v234
        %315 = vmatprep.subr.mxu0 0.0
        %316 = vmatpush1.msra.mxu0 %v235
        %317 = vmatprep.subr.mxu0 0.0
        %318 = vmatpush1.msra.mxu0 %v236
        %319 = vmatprep.subr.mxu0 0.0
        %320 = vmatpush1.msra.mxu0 0.0
        %321 = vmatprep.subr.mxu0 0.0
        %322 = vmatpush1.msra.mxu0 0.0
        %323 = vmatprep.subr.mxu0 0.0
        %324 = vmatpush1.msra.mxu0 0.0
        %325 = vmatprep.subr.mxu0 0.0
        %326 = vmatpush1.msra.mxu0 0.0
        %327 = vmatprep.subr.mxu0 0.0
        %328 = vmatpush1.msra.mxu0 0.0
        %329 = vmatprep.subr.mxu0 0.0
        %330 = vmatpush1.msra.mxu0 0.0
        %331 = vmatprep.subr.mxu0 0.0
        %332 = vmatpush1.msra.mxu0 0.0
        %333 = vmatprep.subr.mxu0 0.0
        %334 = vmatpush1.msra.mxu0 0.0
        %335 = vmatprep.subr.mxu0 0.0
        %336 = vmatpush1.msra.mxu0 0.0
        %337 = vmatprep.subr.mxu0 0.0
        %338 = vmatpush1.msra.mxu0 0.0
        %339 = vmatprep.subr.mxu0 0.0
        %340 = vmatpush1.msra.mxu0 0.0
        %341 = vmatprep.subr.mxu0 0.0
        %342 = vmatpush1.msra.mxu0 0.0
        %343 = vmatprep.subr.mxu0 0.0
        %344 = vmatpush1.msra.mxu0 0.0
        %345 = vmatprep.subr.mxu0 0.0
        %346 = vmatpush1.msra.mxu0 0.0
        %347 = vmatprep.subr.mxu0 0.0
        %348 = vmatpush1.msra.mxu0 0.0
        %349 = vmatprep.subr.mxu0 0.0
        %350 = vmatpush1.msra.mxu0 0.0
        %351 = vmatprep.subr.mxu0 0.0
        %352 = vmatpush1.msra.mxu0 0.0
        %353 = vmatprep.subr.mxu0 0.0
        %354 = vmatpush1.msra.mxu0 0.0
        %355 = vmatprep.subr.mxu0 0.0
        %356 = vmatpush1.msra.mxu0 0.0
        %357 = vmatprep.subr.mxu0 0.0
        %358 = vmatpush1.msra.mxu0 0.0
        %359 = vmatprep.subr.mxu0 0.0
        %360 = vmatpush1.msra.mxu0 0.0
        %361 = vmatprep.subr.mxu0 0.0
        %362 = vmatpush1.msra.mxu0 0.0
        %363 = vmatprep.subr.mxu0 0.0
        %364 = vmatpush1.msra.mxu0 0.0
        %365 = vmatprep.subr.mxu0 0.0
        %366 = vmatpush1.msra.mxu0 0.0
        %367 = vmatprep.mubr.f32.mxu0 0.0
        %368 = vmatmul.mubr.f32.gmra.mrb[0].mxu0 %v301
        %v369 = vpop.f32.mrb[0].mxu0
        %v370 = vadd.f32 0.0, %v369
        %v371 = vpop.f32.mrb[0].mxu0
        %372 = vdwg.mxu0
        %v373 = vmax.f32 %v370, 0.0
        %v374 = vld [vmem:[%s2] sm:$0xf]
        %vm375 = vcmask 31744
        %v377 = vsel %vm375, %v373, 0
        %vm379 = vcmask 1043456
        %v381 = vsel %vm379, %v374, 0
        %383 = vmatprep.subr.mxu0 0.0
        %384 = vmatpush1.msra.mxu0 %v381
        %385 = vmatprep.subr.mxu0 0.0
        %386 = vmatpush1.msra.mxu0 0.0
        %387 = vmatprep.subr.mxu0 0.0
        %388 = vmatpush1.msra.mxu0 0.0
        %389 = vmatprep.subr.mxu0 0.0
        %390 = vmatpush1.msra.mxu0 0.0
        %391 = vmatprep.subr.mxu0 0.0
        %392 = vmatpush1.msra.mxu0 0.0
        %393 = vmatprep.subr.mxu0 0.0
        %394 = vmatpush1.msra.mxu0 0.0
        %395 = vmatprep.subr.mxu0 0.0
        %396 = vmatpush1.msra.mxu0 0.0
        %397 = vmatprep.subr.mxu0 0.0
        %398 = vmatpush1.msra.mxu0 0.0
        %399 = vmatprep.subr.mxu0 0.0
        %400 = vmatpush1.msra.mxu0 0.0
        %401 = vmatprep.subr.mxu0 0.0
        %402 = vmatpush1.msra.mxu0 0.0
        %403 = vmatprep.subr.mxu0 0.0
        %404 = vmatpush1.msra.mxu0 0.0
        %405 = vmatprep.subr.mxu0 0.0
        %406 = vmatpush1.msra.mxu0 0.0
        %407 = vmatprep.subr.mxu0 0.0
        %408 = vmatpush1.msra.mxu0 0.0
        %409 = vmatprep.subr.mxu0 0.0
        %410 = vmatpush1.msra.mxu0 0.0
        %411 = vmatprep.subr.mxu0 0.0
        %412 = vmatpush1.msra.mxu0 0.0
        %413 = vmatprep.subr.mxu0 0.0
        %414 = vmatpush1.msra.mxu0 0.0
        %415 = vmatprep.subr.mxu0 0.0
        %416 = vmatpush1.msra.mxu0 0.0
        %417 = vmatprep.subr.mxu0 0.0
        %418 = vmatpush1.msra.mxu0 0.0
        %419 = vmatprep.subr.mxu0 0.0
        %420 = vmatpush1.msra.mxu0 0.0
        %421 = vmatprep.subr.mxu0 0.0
        %422 = vmatpush1.msra.mxu0 0.0
        %423 = vmatprep.subr.mxu0 0.0
        %424 = vmatpush1.msra.mxu0 0.0
        %425 = vmatprep.subr.mxu0 0.0
        %426 = vmatpush1.msra.mxu0 0.0
        %427 = vmatprep.subr.mxu0 0.0
        %428 = vmatpush1.msra.mxu0 0.0
        %429 = vmatprep.subr.mxu0 0.0
        %430 = vmatpush1.msra.mxu0 0.0
        %431 = vmatprep.subr.mxu0 0.0
        %432 = vmatpush1.msra.mxu0 0.0
        %433 = vmatprep.subr.mxu0 0.0
        %434 = vmatpush1.msra.mxu0 0.0
        %435 = vmatprep.subr.mxu0 0.0
        %436 = vmatpush1.msra.mxu0 0.0
        %437 = vmatprep.subr.mxu0 0.0
        %438 = vmatpush1.msra.mxu0 0.0
        %439 = vmatprep.subr.mxu0 0.0
        %440 = vmatpush1.msra.mxu0 0.0
        %441 = vmatprep.subr.mxu0 0.0
        %442 = vmatpush1.msra.mxu0 0.0
        %443 = vmatprep.subr.mxu0 0.0
        %444 = vmatpush1.msra.mxu0 0.0
        %445 = vmatprep.subr.mxu0 0.0
        %446 = vmatpush1.msra.mxu0 0.0
        %447 = vmatprep.mubr.f32.mxu0 0.0
        %448 = vmatmul.mubr.f32.gmra.mrb[0].mxu0 %v377
        %v449 = vpop.f32.mrb[0].mxu0
        %v450 = vadd.f32 0.0, %v449
        %v451 = vpop.f32.mrb[0].mxu0
        %452 = vdwg.mxu0
        %v453 = vxor.u32 %v450, 2147483648
        %v454 = vmul.f32 %v453, 1.442695
        %v455 = vpow.pop %v454
        %v456 = vadd.f32 %v455, 1.0
        %v457 = vrcp.pop %v456
        %v458 = vmul.f32 1.0, %v457
        %v459 = vlaneseq
        %v460 = vshrl.u32 %v459, 7
        %v461 = vsub.s32 0, %v460
        %v462 = vrot.slane %v458, %v461
        %464 = vbcast.lane.b32.xlu0 %v462, 256
        %v465 = vpop.permute.xlu0 %464
        %s467 = sor.u32 256, 8
        %468 = vbcast.lane.b32.xlu0 %v462, %s467
        %v469 = vpop.permute.xlu0 %468
        %s471 = sor.u32 256, 16
        %472 = vbcast.lane.b32.xlu0 %v462, %s471
        %v473 = vpop.permute.xlu0 %472
        %s475 = sor.u32 256, 24
        %476 = vbcast.lane.b32.xlu0 %v462, %s475
        %v477 = vpop.permute.xlu0 %476
        %s479 = sor.u32 256, 32
        %480 = vbcast.lane.b32.xlu0 %v462, %s479
        %v481 = vpop.permute.xlu0 %480
        %s483 = sor.u32 256, 40
        %484 = vbcast.lane.b32.xlu0 %v462, %s483
        %v485 = vpop.permute.xlu0 %484
        %s487 = sor.u32 256, 48
        %488 = vbcast.lane.b32.xlu0 %v462, %s487
        %v489 = vpop.permute.xlu0 %488
        %s491 = sor.u32 256, 56
        %492 = vbcast.lane.b32.xlu0 %v462, %s491
        %v493 = vpop.permute.xlu0 %492
        %v494 = vmul.f32 %v189, %v465
        %v495 = vmul.f32 %v190, %v465
        %v496 = vmul.f32 %v191, %v469
        %v497 = vmul.f32 %v192, %v469
        %v498 = vmul.f32 %v193, %v473
        %v499 = vmul.f32 %v194, %v473
        %v500 = vmul.f32 %v195, %v477
        %v501 = vmul.f32 %v196, %v477
        %v502 = vmul.f32 %v197, %v481
        %v503 = vmul.f32 %v198, %v481
        %v504 = vmul.f32 %v199, %v485
        %v505 = vmul.f32 %v200, %v485
        %v506 = vmul.f32 %v201, %v489
        %v507 = vmul.f32 %v202, %v489
        %v508 = vmul.f32 %v203, %v493
        %v509 = vmul.f32 %v204, %v493
        %510 = vst [vmem:[%s188] sm:$0xff] %v494
        %511 = vst [vmem:[%s188 + $0x8] sm:$0xff] %v495
        %512 = vst [vmem:[%s188 + $0x10] sm:$0xff] %v496
        %513 = vst [vmem:[%s188 + $0x18] sm:$0xff] %v497
        %514 = vst [vmem:[%s188 + $0x20] sm:$0xff] %v498
        %515 = vst [vmem:[%s188 + $0x28] sm:$0xff] %v499
        %516 = vst [vmem:[%s188 + $0x30] sm:$0xff] %v500
        %517 = vst [vmem:[%s188 + $0x38] sm:$0xff] %v501
        %518 = vst [vmem:[%s188 + $0x40] sm:$0xff] %v502
        %519 = vst [vmem:[%s188 + $0x48] sm:$0xff] %v503
        %520 = vst [vmem:[%s188 + $0x50] sm:$0xff] %v504
        %521 = vst [vmem:[%s188 + $0x58] sm:$0xff] %v505
        %522 = vst [vmem:[%s188 + $0x60] sm:$0xff] %v506
        %523 = vst [vmem:[%s188 + $0x68] sm:$0xff] %v507
        %524 = vst [vmem:[%s188 + $0x70] sm:$0xff] %v508
        %525 = vst [vmem:[%s188 + $0x78] sm:$0xff] %v509
        %s526 = sand.u32 %s96, 1
        %s527 = scalar_lea.sflag [#allocation4], %s526
        %s528 = sand.u32 %s96, 1
        %s529 = smul.addr %s528, 128
        %s530 = scalar_lea.vmem [#allocation5], %s529
        // Predicated region
        $region37: #{tpu_custom_call.1} parent=31 // pred_check
          %p531 = pneg %p106
        $region38: #{tpu_custom_call.1} parent=31 // pred_check_branch
          %533 = sbr.rel (%p531) target = $region40
        $region39: #{tpu_custom_call.1} parent=31 // pred_region
          %s535 = ssub.s32 2048, 2048
          %536 = vsyncadd %s527, %s535
          %s537 = smul.addr %s20, 16
          %s538 = smul.addr %s537, 128
          %s539 = scalar_lea.hbm %s3, %s538
          %s540 = sshll.u32 %s530, 4
          %s541 = int_to_ptr.vmem [resolvable:$true] %s540
          %546 = dma.vmem_to_hbm [thread:$0]  %s541, 2048, %s539, %s527, 256, 256, 16
        $region40: #{tpu_custom_call.1} parent=31 // pred_fallthru
          _
      $region32: #{tpu_custom_call.1} parent=5 // pred_fallthru
        _
      %p547 = scmp.le.s32.totalorder 2, %s15
      // Predicated region
      $region41: #{tpu_custom_call.1} parent=5 // pred_check
        %p548 = pneg %p547
      $region42: #{tpu_custom_call.1} parent=5 // pred_check_branch
        %550 = sbr.rel (%p548) target = $region44
      $region43: #{tpu_custom_call.1} parent=5 // pred_region
        %s551 = ssub.s32 %s15, 2
        // Predicated region
        $region45: #{tpu_custom_call.1} parent=43 // pred_check
          %p552 = pneg %p112
        $region46: #{tpu_custom_call.1} parent=43 // pred_check_branch
          %554 = sbr.rel (%p552) target = $region48
        $region47: #{tpu_custom_call.1} parent=43 // pred_region
          %s555 = sand.u32 %s97, 1
          %s556 = scalar_lea.sflag [#allocation4], %s555
          %s557 = sand.u32 %s97, 1
          %s558 = smul.addr %s557, 128
          %s559 = scalar_lea.vmem [#allocation5], %s558
          %560 = dma.done %s556, 2048
        $region48: #{tpu_custom_call.1} parent=43 // pred_fallthru
          _
      $region44: #{tpu_custom_call.1} parent=5 // pred_fallthru
        _
    $region6: #{tpu_custom_call.1} parent=1 // loop_footer
      %s19 = sadd.s32 1, %s15
    $region7: #{tpu_custom_call.1} parent=1 // loop_footer_branch
      %14 = sbr.rel target = $region3
    $region8: #{tpu_custom_call.1} parent=1 // loop_exit
      _
    %561 = vsyncpa [#allocation3], 1
    %s562 = scalar_lea.sflag [#allocation3], 1
    %563 = vsyncpa %s562, 1
    %564 = vsyncpa [#allocation4], 1
    %s565 = scalar_lea.sflag [#allocation4], 1
    %566 = vsyncpa %s565, 1

</llo_original>
